<compile_context>
chip_gen: v5e
topology: v5e:2x2
jax: 0.10.0
libtpu: 0.0.40
codegen_flags: <defaults>
</compile_context>

<pallas_src>
import math

import jax
import jax.numpy as jnp
from jax import lax
from jax.experimental import pallas as pl
from jax.experimental.pallas import tpu as pltpu

ATOM_DIM = 34
HID = 256
PROT_DIM = 32
NUM_CLASSES = 2

# Scoped-VMEM budget that is safe on v5e/v6e (128 MiB) and v7x (64 MiB).
_VMEM_LIMIT = 32 * 1024 * 1024


def _round_up(x, m):
    return ((x + m - 1) // m) * m


# ---------------- HAN-style hypergraph conv (hgnn1) --------------------------
# TODO(synk): the exact HAN(use_attention=True) layer is an external class not
# given in the module; implemented as adjacency message passing
# relu((adj @ x) @ W + b), tiled over adj rows (parallel) x adj cols (reduce).
def _hgnn_kernel(x_ref, adj_ref, w_ref, b_ref, out_ref, acc_ref):
    k = pl.program_id(1)

    @pl.when(k == 0)
    def _():
        acc_ref[...] = jnp.zeros_like(acc_ref)

    # adj block [TM, TK] bf16 @ x block [TK, ATOM_DIM] bf16 -> f32 accumulate.
    acc_ref[...] += jnp.dot(adj_ref[...], x_ref[...],
                            preferred_element_type=jnp.float32)

    @pl.when(k == pl.num_programs(1) - 1)
    def _():
        h = jnp.dot(acc_ref[...].astype(jnp.bfloat16), w_ref[...],
                    preferred_element_type=jnp.float32)
        out_ref[...] = jnp.maximum(h + b_ref[...], 0.0).astype(out_ref.dtype)


def hgnn_forward(x, adj, w, b):
    a = x.shape[0]
    tile = min(512, _round_up(a, 128))      # keeps 2x buffers well under VMEM
    a_pad = _round_up(a, tile)
    x_p = jnp.pad(x.astype(jnp.bfloat16), ((0, a_pad - a), (0, 0)))
    adj_p = jnp.pad(adj.astype(jnp.bfloat16),
                    ((0, a_pad - a), (0, a_pad - a)))
    grid = (a_pad // tile, a_pad // tile)

    out = pl.pallas_call(
        _hgnn_kernel,
        out_shape=jax.ShapeDtypeStruct((a_pad, HID), jnp.bfloat16),
        grid_spec=pltpu.PrefetchScalarGridSpec(
            num_scalar_prefetch=0,
            grid=grid,
            in_specs=[
                pl.BlockSpec((tile, ATOM_DIM), lambda i, k: (k, 0)),   # x
                pl.BlockSpec((tile, tile), lambda i, k: (i, k)),       # adj
                pl.BlockSpec((ATOM_DIM, HID), lambda i, k: (0, 0)),    # W
                pl.BlockSpec((1, HID), lambda i, k: (0, 0)),           # b
            ],
            out_specs=pl.BlockSpec((tile, HID), lambda i, k: (i, 0)),
            scratch_shapes=[pltpu.VMEM((tile, ATOM_DIM), jnp.float32)],
        ),
        compiler_params=pltpu.CompilerParams(
            dimension_semantics=("parallel", "arbitrary"),
            vmem_limit_bytes=_VMEM_LIMIT),
    )(x_p, adj_p, w, b)
    return out[:a]


# --------------- fused encoder + masked cross-attention decoder --------------
# TODO(synk): the real `encoder`/`decoder` are injected at construction time and
# not defined in the module; implemented as per-token linear+ReLU encoder fused
# with a masked cross-attention layer (compound atoms = queries, protein tokens
# = keys/values) followed by a compound-mask-weighted mean pool.  The tiny
# [HID, 2] classifier head runs in XLA so the kernel output stays lane-dense.
def _decoder_kernel(comp_ref, prot_ref, cmask_ref, pmask_ref,
                    wenc_ref, benc_ref, wq_ref, wkv_ref, out_ref):
    comp = comp_ref[0]                      # [La, HID]  bf16
    prot = prot_ref[0]                      # [Lp, PROT_DIM] bf16
    cm = cmask_ref[0]                       # [La, 1] f32
    pm = pmask_ref[0]                       # [1, Lp] f32

    # Fused protein encoder: relu(prot @ Wenc + b)   (enc_src never hits HBM)
    enc = jnp.dot(prot, wenc_ref[...], preferred_element_type=jnp.float32)
    enc = jnp.maximum(enc + benc_ref[...], 0.0)                    # [Lp, HID] f32

    # Fused K|V projection: one lane-dense [HID, 2*HID] matmul.
    kv = jnp.dot(enc.astype(jnp.bfloat16), wkv_ref[...],
                 preferred_element_type=jnp.float32)               # [Lp, 2*HID]
    k = kv[:, :HID].astype(jnp.bfloat16)
    v = kv[:, HID:].astype(jnp.bfloat16)

    q = jnp.dot(comp, wq_ref[...], preferred_element_type=jnp.float32)  # [La, HID]

    scale = 1.0 / math.sqrt(HID)
    s = lax.dot_general(q.astype(jnp.bfloat16), k, (((1,), (1,)), ((), ())),
                        preferred_element_type=jnp.float32) * scale      # [La, Lp]
    s = jnp.where(pm > 0.0, s, -1e9)                               # protein mask
    s = s - jnp.max(s, axis=-1, keepdims=True)
    e = jnp.exp(s)
    denom = jnp.sum(e, axis=-1, keepdims=True)
    attn = e * pl.reciprocal(denom + 1e-9, approx=True)            # eps: no NaN
    ctx = jnp.dot(attn.astype(jnp.bfloat16), v,
                  preferred_element_type=jnp.float32)              # [La, HID]

    # Compound-mask-weighted mean pool (f32 on the VPU).
    pooled = jnp.sum(ctx * cm, axis=0, keepdims=True)              # [1, HID]
    cnt = jnp.sum(cm, axis=0, keepdims=True)                       # [1, 1]
    out_ref[0] = pooled * pl.reciprocal(cnt + 1e-9, approx=True)


def decoder_forward(comp, prot, cmask, pmask, w_enc, b_enc, wq, wkv):
    n, la, _ = comp.shape
    lp = prot.shape[1]
    pooled = pl.pallas_call(
        _decoder_kernel,
        out_shape=jax.ShapeDtypeStruct((n, 1, HID), jnp.float32),
        grid=(n,),
        in_specs=[
            pl.BlockSpec((1, la, HID), lambda b: (b, 0, 0)),        # compound
            pl.BlockSpec((1, lp, PROT_DIM), lambda b: (b, 0, 0)),   # raw protein
            pl.BlockSpec((1, la, 1), lambda b: (b, 0, 0)),          # compound mask
            pl.BlockSpec((1, 1, lp), lambda b: (b, 0, 0)),          # protein mask
            pl.BlockSpec((PROT_DIM, HID), lambda b: (0, 0)),        # W_enc
            pl.BlockSpec((1, HID), lambda b: (0, 0)),               # b_enc
            pl.BlockSpec((HID, HID), lambda b: (0, 0)),             # Wq
            pl.BlockSpec((HID, 2 * HID), lambda b: (0, 0)),         # Wk|Wv fused
        ],
        out_specs=pl.BlockSpec((1, 1, HID), lambda b: (b, 0, 0)),   # lane-dense
        compiler_params=pltpu.CompilerParams(
            dimension_semantics=("parallel",),      # batch axis -> both TCs (v7x)
            vmem_limit_bytes=_VMEM_LIMIT),
    )(comp, prot, cmask, pmask, w_enc, b_enc, wq, wkv)
    return pooled.reshape(n, HID)


# ------------------------------ Predictor ------------------------------------
class PredictorPallas:
    def __init__(self, key, atom_dim=ATOM_DIM):
        keys = jax.random.split(key, 9)
        stdv = 1.0 / math.sqrt(HID)   # matches init_weight(): U(-1/sqrt(256), 1/sqrt(256))
        u = lambda k, shape: jax.random.uniform(k, shape, jnp.float32, -stdv, stdv)
        # MXU-facing weights stored in bf16 (accumulation stays f32 in-kernel).
        self.w_hgnn = u(keys[0], (atom_dim, HID)).astype(jnp.bfloat16)
        self.b_hgnn = u(keys[1], (1, HID))
        self.w_enc = u(keys[2], (PROT_DIM, HID)).astype(jnp.bfloat16)
        self.b_enc = u(keys[3], (1, HID))
        self.wq = u(keys[4], (HID, HID)).astype(jnp.bfloat16)
        wk = u(keys[5], (HID, HID))
        wv = u(keys[6], (HID, HID))
        self.wkv = jnp.concatenate([wk, wv], axis=1).astype(jnp.bfloat16)
        self.wc = u(keys[7], (HID, NUM_CLASSES))
        self.bc = u(keys[8], (1, NUM_CLASSES))
        # NOTE: torch `self.weight` and `self.hgnn2` are never used in forward().

    def make_masks(self, atom_num, protein_num, compound_max_len, protein_max_len):
        # Vectorized iota-compare (no per-sample scatter loop).
        a = jnp.asarray(atom_num, jnp.int32)[:, None]
        p = jnp.asarray(protein_num, jnp.int32)[:, None]
        cmask = (jnp.arange(compound_max_len, dtype=jnp.int32)[None, :] < a)
        pmask = (jnp.arange(protein_max_len, dtype=jnp.int32)[None, :] < p)
        return cmask.astype(jnp.float32), pmask.astype(jnp.float32)

    def forward(self, compound, adj, protein, atom_num, protein_num,
                node_num, edge_num, size, atoms_len, edge_attr):
        protein_max_len = protein.shape[1]
        # Build compound mask directly at atoms_len width (== the original
        # max(atom_num)-wide mask zero-padded to atoms_len).
        cmask, pmask = self.make_masks(atom_num, protein_num,
                                       atoms_len, protein_max_len)
        cmask3 = cmask[:, :, None]            # [N, La, 1]
        pmask3 = pmask[:, None, :]            # [N, 1, Lp]

        # hgnn1 (tiled adjacency message passing), bf16 output for the MXU.
        comp_feats = hgnn_forward(compound, adj, self.w_hgnn, self.b_hgnn)  # [A, HID]

        # Per-molecule rows -> [N, atoms_len, HID] via one fused gather
        # (rows past a molecule's end may carry neighbour features; harmless —
        #  the compound mask zeroes them out of the pooled context).
        # TODO(synk): could be folded into the decoder via scalar-prefetched
        # node offsets + manual DMA to skip this HBM materialization entirely.
        comp_padded = jnp.pad(comp_feats, ((0, atoms_len), (0, 0)))
        starts = jnp.asarray(node_num[:-1], jnp.int32)
        comp_batched = jax.vmap(
            lambda s: lax.dynamic_slice(comp_padded, (s, 0), (atoms_len, HID))
        )(starts)                             # [N, atoms_len, HID] bf16

        # Fused encoder + masked cross-attention + mask-weighted pooling.
        pooled = decoder_forward(comp_batched, protein.astype(jnp.bfloat16),
                                 cmask3, pmask3, self.w_enc, self.b_enc,
                                 self.wq, self.wkv)                 # [N, HID] f32

        # Tiny MXU-hostile [HID, 2] classifier head stays in plain XLA so the
        # Pallas output remains lane-dense.
        logits = jnp.dot(pooled, self.wc) + self.bc                 # [N, 2]
        return logits


if __name__ == "__main__":
    key = jax.random.PRNGKey(0)
    k1, k2, k3 = jax.random.split(key, 3)

    # small synthetic problem
    atom_num = [5, 8]            # atoms per molecule
    protein_num = [10, 16]       # valid protein tokens per sample
    node_num = [0, 5, 13]        # prefix offsets into the flat atom table
    total_atoms = node_num[-1]
    atoms_len = max(atom_num)    # pad target for stacked compounds
    n = len(atom_num)
    lp = 16                      # protein sequence length

    compound = jax.random.normal(k1, (total_atoms, ATOM_DIM), jnp.float32)
    adj = (jax.random.uniform(k2, (total_atoms, total_atoms)) > 0.5).astype(jnp.float32)
    adj = jnp.maximum(adj, jnp.eye(total_atoms, dtype=jnp.float32))  # self-loops
    protein = jax.random.normal(k3, (n, lp, PROT_DIM), jnp.float32)

    model = PredictorPallas(jax.random.PRNGKey(42))
    out = model.forward(compound, adj, protein, atom_num, protein_num,
                        node_num, None, None, atoms_len, None)
    out = jax.block_until_ready(out)
    assert out.shape == (n, NUM_CLASSES) and out.dtype == jnp.float32
    assert bool(jnp.all(jnp.isfinite(out)))
    print("KERNEL_OK")
</pallas_src>

<mosaic_0001>
module attributes {stable_mosaic.version = 11 : i64} {
  func.func @_hgnn_kernel(%arg0: i32, %arg1: i32, %arg2: memref<128x34xbf16, #tpu.memory_space<vmem>>, %arg3: memref<128x128xbf16, #tpu.memory_space<vmem>>, %arg4: memref<34x256xbf16, #tpu.memory_space<vmem>>, %arg5: memref<1x256xf32, #tpu.memory_space<vmem>>, %arg6: memref<128x256xbf16, #tpu.memory_space<vmem>>, %arg7: memref<128x34xf32, #tpu.memory_space<vmem>>) attributes {dimension_semantics = [#tpu.dimension_semantics<parallel>, #tpu.dimension_semantics<arbitrary>], iteration_bounds = array<i64: 1, 1>, scalar_prefetch = 0 : i64, scratch_operands = 1 : i64, tpu.core_type = #tpu.core_type<tc>, window_params = [{transform_indices = @transform_0, window_bounds = array<i64: 128, 34>}, {transform_indices = @transform_1, window_bounds = array<i64: 128, 128>}, {pipeline_mode = #tpu.pipeline_mode<synchronous>, transform_indices = @transform_2, window_bounds = array<i64: 34, 256>}, {pipeline_mode = #tpu.pipeline_mode<synchronous>, transform_indices = @transform_3, window_bounds = array<i64: 1, 256>}, {transform_indices = @transform_4, window_bounds = array<i64: 128, 256>}]} {
    %c0_i32 = arith.constant 0 : i32
    %0 = arith.cmpi eq, %arg1, %c0_i32 : i32
    %1 = arith.extui %0 : i1 to i32
    %c0_i32_0 = arith.constant 0 : i32
    %2 = arith.cmpi ne, %1, %c0_i32_0 : i32
    scf.if %2 {
      %cst_10 = arith.constant 0.000000e+00 : f32
      %12 = vector.broadcast %cst_10 : f32 to vector<128x34xf32>
      %c0_11 = arith.constant 0 : index
      %c0_12 = arith.constant 0 : index
      %13 = vector.load %arg7[%c0_11, %c0_12] : memref<128x34xf32, #tpu.memory_space<vmem>>, vector<128x34xf32>
      tpu.vector_store %arg7[%c0_11, %c0_12], %12 {strides = array<i32>} : memref<128x34xf32, #tpu.memory_space<vmem>>, vector<128x34xf32>,
    } else {
    }
    %c0 = arith.constant 0 : index
    %c0_1 = arith.constant 0 : index
    %3 = vector.load %arg7[%c0, %c0_1] : memref<128x34xf32, #tpu.memory_space<vmem>>, vector<128x34xf32>
    %c0_2 = arith.constant 0 : index
    %c0_3 = arith.constant 0 : index
    %4 = vector.load %arg3[%c0_2, %c0_3] : memref<128x128xbf16, #tpu.memory_space<vmem>>, vector<128x128xbf16>
    %c0_4 = arith.constant 0 : index
    %c0_5 = arith.constant 0 : index
    %5 = vector.load %arg2[%c0_4, %c0_5] : memref<128x34xbf16, #tpu.memory_space<vmem>>, vector<128x34xbf16>
    %cst = arith.constant dense<0.000000e+00> : vector<128x34xf32>
    %6 = tpu.matmul %4, %5, %cst {dimension_numbers = #tpu.dot_dimension_numbers<[1], [0], [0], [1], [0, 0, 1, 1], [], []>} : vector<128x128xbf16>, vector<128x34xbf16>, vector<128x34xf32> -> vector<128x34xf32>
    %7 = arith.addf %3, %6 : vector<128x34xf32>
    %c0_6 = arith.constant 0 : index
    %c0_7 = arith.constant 0 : index
    %8 = vector.load %arg7[%c0_6, %c0_7] : memref<128x34xf32, #tpu.memory_space<vmem>>, vector<128x34xf32>
    tpu.vector_store %arg7[%c0_6, %c0_7], %7 {strides = array<i32>} : memref<128x34xf32, #tpu.memory_space<vmem>>, vector<128x34xf32>,
    %c0_i32_8 = arith.constant 0 : i32
    %9 = arith.cmpi eq, %arg1, %c0_i32_8 : i32
    %10 = arith.extui %9 : i1 to i32
    %c0_i32_9 = arith.constant 0 : i32
    %11 = arith.cmpi ne, %10, %c0_i32_9 : i32
    scf.if %11 {
      %c0_10 = arith.constant 0 : index
      %c0_11 = arith.constant 0 : index
      %12 = vector.load %arg7[%c0_10, %c0_11] : memref<128x34xf32, #tpu.memory_space<vmem>>, vector<128x34xf32>
      %13 = arith.truncf %12 : vector<128x34xf32> to vector<128x34xbf16>
      %c0_12 = arith.constant 0 : index
      %c0_13 = arith.constant 0 : index
      %14 = vector.load %arg4[%c0_12, %c0_13] : memref<34x256xbf16, #tpu.memory_space<vmem>>, vector<34x256xbf16>
      %cst_14 = arith.constant dense<0.000000e+00> : vector<128x256xf32>
      %15 = tpu.matmul %13, %14, %cst_14 {dimension_numbers = #tpu.dot_dimension_numbers<[1], [0], [0], [1], [0, 0, 1, 1], [], []>} : vector<128x34xbf16>, vector<34x256xbf16>, vector<128x256xf32> -> vector<128x256xf32>
      %c0_15 = arith.constant 0 : index
      %c0_16 = arith.constant 0 : index
      %16 = vector.load %arg5[%c0_15, %c0_16] : memref<1x256xf32, #tpu.memory_space<vmem>>, vector<1x256xf32>
      %17 = vector.broadcast %16 : vector<1x256xf32> to vector<128x256xf32>
      %18 = arith.addf %15, %17 : vector<128x256xf32>
      %cst_17 = arith.constant 0.000000e+00 : f32
      %19 = vector.broadcast %cst_17 : f32 to vector<128x256xf32>
      %20 = arith.maximumf %18, %19 : vector<128x256xf32>
      %21 = arith.truncf %20 : vector<128x256xf32> to vector<128x256xbf16>
      %c0_18 = arith.constant 0 : index
      %c0_19 = arith.constant 0 : index
      %22 = vector.load %arg6[%c0_18, %c0_19] : memref<128x256xbf16, #tpu.memory_space<vmem>>, vector<128x256xbf16>
      tpu.vector_store %arg6[%c0_18, %c0_19], %21 {strides = array<i32>} : memref<128x256xbf16, #tpu.memory_space<vmem>>, vector<128x256xbf16>,
    } else {
    }
    return
  }
  func.func @transform_0(%arg0: i32, %arg1: i32) -> (i32, i32) {
    %c0_i32 = arith.constant 0 : i32
    %c0_i32_0 = arith.constant 0 : i32
    return %arg1, %c0_i32 : i32, i32
  }
  func.func @transform_1(%arg0: i32, %arg1: i32) -> (i32, i32) {
    %c0_i32 = arith.constant 0 : i32
    return %arg0, %arg1 : i32, i32
  }
  func.func @transform_2(%arg0: i32, %arg1: i32) -> (i32, i32) {
    %c0_i32 = arith.constant 0 : i32
    %c0_i32_0 = arith.constant 0 : i32
    %c0_i32_1 = arith.constant 0 : i32
    return %c0_i32, %c0_i32_0 : i32, i32
  }
  func.func @transform_3(%arg0: i32, %arg1: i32) -> (i32, i32) {
    %c0_i32 = arith.constant 0 : i32
    %c0_i32_0 = arith.constant 0 : i32
    %c0_i32_1 = arith.constant 0 : i32
    return %c0_i32, %c0_i32_0 : i32, i32
  }
  func.func @transform_4(%arg0: i32, %arg1: i32) -> (i32, i32) {
    %c0_i32 = arith.constant 0 : i32
    %c0_i32_0 = arith.constant 0 : i32
    return %arg0, %c0_i32 : i32, i32
  }
}

</mosaic_0001>

<llo_original>
// kernel: tpu_custom_call.1
$region0: #{tpu_custom_call.1}
  #allocation0 [shape = 'u32[]', space=smem, size = 0x4, offset = 0x4, fixed_abs, tag = 'smem constant byte address 0x4 - core index']
  #allocation1 [shape = 'u32[72,128]{1,0:T(1,128)}', space=vmem, size = 0x9000, scoped, tag = 'internal scratch']
  #allocation2 [shape = 'f32[128,34]{1,0:T(8,128)}', space=vmem, size = 0x10000, scoped, tag = 'scratch operand']
  %s0 = inlined_call_operand.vmem [shape: bf16[128,34], index: 0, kind: input, shape index: {}]
  %s1 = inlined_call_operand.vmem [shape: bf16[128,128], index: 1, kind: input, shape index: {}]
  %s2 = inlined_call_operand.hbm [shape: bf16[34,256], index: 2, kind: input, shape index: {}]
  %s3 = inlined_call_operand.vmem [shape: f32[1,256], index: 3, kind: input, shape index: {}]
  %s4 = inlined_call_operand.hbm [shape: bf16[128,256], index: 4, kind: output, shape index: {}]
  %s5 = sld [smem:[#allocation0]]
  $region38: #{tpu_custom_call.1} parent=0
    _
  %s7 = ssub.s32 1, %s5
  %s8 = scalar_select 0, %s7, %s5
  $region1: #{tpu_custom_call.1} parent=0
    #allocation3 [shape = 'u8[20480]{0}', space=vmem, size = 0x5000, scoped, tag = 'input window, operand 2, single buffered']
    #allocation4 [shape = 's32[1]{0}', space=sflag, size = 0x4, scoped, tag = 'scoped memory for tpu_custom_call.1']
    #allocation5 [shape = 's32[1]{0}', space=sflag, size = 0x4, scoped, tag = 'scoped memory for tpu_custom_call.1']
    #allocation6 [shape = 'u8[65536]{0}', space=vmem, size = 0x10000, scoped, tag = 'output window, operand 0, single buffered']
    %9 = vsyncpa [#allocation4], 0
    %10 = vsyncpa [#allocation5], 0
    // Predicated region
    $region2: #{tpu_custom_call.1} parent=1 // pred_check
      _
    $region3: #{tpu_custom_call.1} parent=1 // pred_check_branch
      %12 = sbr.rel (0) target = $region5
    $region4: #{tpu_custom_call.1} parent=1 // pred_region
      _
    $region5: #{tpu_custom_call.1} parent=1 // pred_fallthru
      _
    // Predicated region
    $region6: #{tpu_custom_call.1} parent=1 // pred_check
      _
    $region7: #{tpu_custom_call.1} parent=1 // pred_check_branch
      %14 = sbr.rel (0) target = $region9
    $region8: #{tpu_custom_call.1} parent=1 // pred_region
      _
    $region9: #{tpu_custom_call.1} parent=1 // pred_fallthru
      _
    // Predicated region
    $region10: #{tpu_custom_call.1} parent=1 // pred_check
      _
    $region11: #{tpu_custom_call.1} parent=1 // pred_check_branch
      %16 = sbr.rel (0) target = $region13
    $region12: #{tpu_custom_call.1} parent=1 // pred_region
      %18 = vsyncadd [#allocation4], 0
      %s19 = sshll.u32 %s2, 4
      %s20 = int_to_ptr.hbm [resolvable:$true] %s19
      %s21 = sshll.u32 [#allocation3], 4
      %s22 = int_to_ptr.vmem [resolvable:$true] %s21
      %27 = dma.hbm_to_vmem [thread:$0]  %s20, 640, %s22, [#allocation4], 128, 128, 8
    $region13: #{tpu_custom_call.1} parent=1 // pred_fallthru
      _
    // Predicated region
    $region14: #{tpu_custom_call.1} parent=1 // pred_check
      _
    $region15: #{tpu_custom_call.1} parent=1 // pred_check_branch
      %29 = sbr.rel (0) target = $region17
    $region16: #{tpu_custom_call.1} parent=1 // pred_region
      _
    $region17: #{tpu_custom_call.1} parent=1 // pred_fallthru
      _
    // Predicated region
    $region18: #{tpu_custom_call.1} parent=1 // pred_check
      _
    $region19: #{tpu_custom_call.1} parent=1 // pred_check_branch
      %31 = sbr.rel (0) target = $region21
    $region20: #{tpu_custom_call.1} parent=1 // pred_region
      %33 = dma.done [#allocation4], 640
    $region21: #{tpu_custom_call.1} parent=1 // pred_fallthru
      _
    %p35 = scmp.eq.s32.totalorder 0, 0
    // Predicated region
    $region22: #{tpu_custom_call.1} parent=1 // pred_check
      %p36 = pneg %p35
    $region23: #{tpu_custom_call.1} parent=1 // pred_check_branch
      %38 = sbr.rel (%p36) target = $region25
    $region24: #{tpu_custom_call.1} parent=1 // pred_region
      %vm39 = vcmask 277504
      %40 = vst.msk [vmem:[#allocation2] sm:$0xff] %vm39, 0.0
      %41 = vst.msk [vmem:[#allocation2 + $0x8] sm:$0xff] %vm39, 0.0
      %42 = vst.msk [vmem:[#allocation2 + $0x10] sm:$0xff] %vm39, 0.0
      %43 = vst.msk [vmem:[#allocation2 + $0x18] sm:$0xff] %vm39, 0.0
      %44 = vst.msk [vmem:[#allocation2 + $0x20] sm:$0xff] %vm39, 0.0
      %45 = vst.msk [vmem:[#allocation2 + $0x28] sm:$0xff] %vm39, 0.0
      %46 = vst.msk [vmem:[#allocation2 + $0x30] sm:$0xff] %vm39, 0.0
      %47 = vst.msk [vmem:[#allocation2 + $0x38] sm:$0xff] %vm39, 0.0
      %48 = vst.msk [vmem:[#allocation2 + $0x40] sm:$0xff] %vm39, 0.0
      %49 = vst.msk [vmem:[#allocation2 + $0x48] sm:$0xff] %vm39, 0.0
      %50 = vst.msk [vmem:[#allocation2 + $0x50] sm:$0xff] %vm39, 0.0
      %51 = vst.msk [vmem:[#allocation2 + $0x58] sm:$0xff] %vm39, 0.0
      %52 = vst.msk [vmem:[#allocation2 + $0x60] sm:$0xff] %vm39, 0.0
      %53 = vst.msk [vmem:[#allocation2 + $0x68] sm:$0xff] %vm39, 0.0
      %54 = vst.msk [vmem:[#allocation2 + $0x70] sm:$0xff] %vm39, 0.0
      %55 = vst.msk [vmem:[#allocation2 + $0x78] sm:$0xff] %vm39, 0.0
    $region25: #{tpu_custom_call.1} parent=1 // pred_fallthru
      _
    %v56 = vld [vmem:[#allocation2] sm:$0xff]
    %v57 = vld [vmem:[#allocation2 + $0x8] sm:$0xff]
    %v58 = vld [vmem:[#allocation2 + $0x10] sm:$0xff]
    %v59 = vld [vmem:[#allocation2 + $0x18] sm:$0xff]
    %v60 = vld [vmem:[#allocation2 + $0x20] sm:$0xff]
    %v61 = vld [vmem:[#allocation2 + $0x28] sm:$0xff]
    %v62 = vld [vmem:[#allocation2 + $0x30] sm:$0xff]
    %v63 = vld [vmem:[#allocation2 + $0x38] sm:$0xff]
    %v64 = vld [vmem:[#allocation2 + $0x40] sm:$0xff]
    %v65 = vld [vmem:[#allocation2 + $0x48] sm:$0xff]
    %v66 = vld [vmem:[#allocation2 + $0x50] sm:$0xff]
    %v67 = vld [vmem:[#allocation2 + $0x58] sm:$0xff]
    %v68 = vld [vmem:[#allocation2 + $0x60] sm:$0xff]
    %v69 = vld [vmem:[#allocation2 + $0x68] sm:$0xff]
    %v70 = vld [vmem:[#allocation2 + $0x70] sm:$0xff]
    %v71 = vld [vmem:[#allocation2 + $0x78] sm:$0xff]
    %v72 = vld [vmem:[%s1] sm:$0xf]
    %v73 = vld [vmem:[%s1 + $0x4] sm:$0xf]
    %v74 = vld [vmem:[%s1 + $0x8] sm:$0xf]
    %v75 = vld [vmem:[%s1 + $0xc] sm:$0xf]
    %v76 = vld [vmem:[%s1 + $0x10] sm:$0xf]
    %v77 = vld [vmem:[%s1 + $0x14] sm:$0xf]
    %v78 = vld [vmem:[%s1 + $0x18] sm:$0xf]
    %v79 = vld [vmem:[%s1 + $0x1c] sm:$0xf]
    %v80 = vld [vmem:[%s1 + $0x20] sm:$0xf]
    %v81 = vld [vmem:[%s1 + $0x24] sm:$0xf]
    %v82 = vld [vmem:[%s1 + $0x28] sm:$0xf]
    %v83 = vld [vmem:[%s1 + $0x2c] sm:$0xf]
    %v84 = vld [vmem:[%s1 + $0x30] sm:$0xf]
    %v85 = vld [vmem:[%s1 + $0x34] sm:$0xf]
    %v86 = vld [vmem:[%s1 + $0x38] sm:$0xf]
    %v87 = vld [vmem:[%s1 + $0x3c] sm:$0xf]
    %v88 = vld [vmem:[%s0] sm:$0xf]
    %v89 = vld [vmem:[%s0 + $0x4] sm:$0xf]
    %v90 = vld [vmem:[%s0 + $0x8] sm:$0xf]
    %v91 = vld [vmem:[%s0 + $0xc] sm:$0xf]
    %v92 = vld [vmem:[%s0 + $0x10] sm:$0xf]
    %v93 = vld [vmem:[%s0 + $0x14] sm:$0xf]
    %v94 = vld [vmem:[%s0 + $0x18] sm:$0xf]
    %v95 = vld [vmem:[%s0 + $0x1c] sm:$0xf]
    %v96 = vld [vmem:[%s0 + $0x20] sm:$0xf]
    %v97 = vld [vmem:[%s0 + $0x24] sm:$0xf]
    %v98 = vld [vmem:[%s0 + $0x28] sm:$0xf]
    %v99 = vld [vmem:[%s0 + $0x2c] sm:$0xf]
    %v100 = vld [vmem:[%s0 + $0x30] sm:$0xf]
    %v101 = vld [vmem:[%s0 + $0x34] sm:$0xf]
    %v102 = vld [vmem:[%s0 + $0x38] sm:$0xf]
    %v103 = vld [vmem:[%s0 + $0x3c] sm:$0xf]
    %v120 = vunpack.c.l.b16 %v72
    %v121 = vunpack.c.l.b16 %v73
    %v122 = vunpack.c.l.b16 %v74
    %v123 = vunpack.c.l.b16 %v75
    %v124 = vunpack.c.l.b16 %v76
    %v125 = vunpack.c.l.b16 %v77
    %v126 = vunpack.c.l.b16 %v78
    %v127 = vunpack.c.l.b16 %v79
    %v128 = vunpack.c.l.b16 %v80
    %v129 = vunpack.c.l.b16 %v81
    %v130 = vunpack.c.l.b16 %v82
    %v131 = vunpack.c.l.b16 %v83
    %v132 = vunpack.c.l.b16 %v84
    %v133 = vunpack.c.l.b16 %v85
    %v134 = vunpack.c.l.b16 %v86
    %v135 = vunpack.c.l.b16 %v87
    %v136 = vpack.c.b16 %v121, %v120
    %v137 = vpack.c.b16 %v123, %v122
    %v138 = vpack.c.b16 %v125, %v124
    %v139 = vpack.c.b16 %v127, %v126
    %v140 = vpack.c.b16 %v129, %v128
    %v141 = vpack.c.b16 %v131, %v130
    %v142 = vpack.c.b16 %v133, %v132
    %v143 = vpack.c.b16 %v135, %v134
    %v168 = vunpack.c.l.b16 %v88
    %v169 = vunpack.c.l.b16 %v89
    %v170 = vunpack.c.l.b16 %v90
    %v171 = vunpack.c.l.b16 %v91
    %v172 = vunpack.c.l.b16 %v92
    %v173 = vunpack.c.l.b16 %v93
    %v174 = vunpack.c.l.b16 %v94
    %v175 = vunpack.c.l.b16 %v95
    %v176 = vunpack.c.l.b16 %v96
    %v177 = vunpack.c.l.b16 %v97
    %v178 = vunpack.c.l.b16 %v98
    %v179 = vunpack.c.l.b16 %v99
    %v180 = vunpack.c.l.b16 %v100
    %v181 = vunpack.c.l.b16 %v101
    %v182 = vunpack.c.l.b16 %v102
    %v183 = vunpack.c.l.b16 %v103
    %v184 = vpack.c.b16 %v169, %v168
    %v185 = vpack.c.b16 %v171, %v170
    %v186 = vpack.c.b16 %v173, %v172
    %v187 = vpack.c.b16 %v175, %v174
    %v188 = vpack.c.b16 %v177, %v176
    %v189 = vpack.c.b16 %v179, %v178
    %v190 = vpack.c.b16 %v181, %v180
    %v191 = vpack.c.b16 %v183, %v182
    %200 = vmatpush.bf16.msra.mxu0 %v191
    %201 = vmatpush.bf16.msra.mxu0 %v190
    %202 = vmatpush.bf16.msra.mxu0 %v189
    %203 = vmatpush.bf16.msra.mxu0 %v188
    %204 = vmatpush.bf16.msra.mxu0 %v187
    %205 = vmatpush.bf16.msra.mxu0 %v186
    %206 = vmatpush.bf16.msra.mxu0 %v185
    %207 = vmatpush.bf16.msra.mxu0 %v184
    %208 = vmatmul.bf16.gmra.mxu0 %v136
    %v209 = vpop.f32.mrf.mxu0
    %v210 = vadd.f32 0.0, %v209
    %v211 = vpop.f32.mrf.mxu0
    %v212 = vadd.f32 0.0, %v211
    %213 = vmatmul.bf16.gmra.mxu0 %v137
    %v214 = vpop.f32.mrf.mxu0
    %v215 = vadd.f32 0.0, %v214
    %v216 = vpop.f32.mrf.mxu0
    %v217 = vadd.f32 0.0, %v216
    %218 = vmatmul.bf16.gmra.mxu0 %v138
    %v219 = vpop.f32.mrf.mxu0
    %v220 = vadd.f32 0.0, %v219
    %v221 = vpop.f32.mrf.mxu0
    %v222 = vadd.f32 0.0, %v221
    %223 = vmatmul.bf16.gmra.mxu0 %v139
    %v224 = vpop.f32.mrf.mxu0
    %v225 = vadd.f32 0.0, %v224
    %v226 = vpop.f32.mrf.mxu0
    %v227 = vadd.f32 0.0, %v226
    %228 = vmatmul.bf16.gmra.mxu0 %v140
    %v229 = vpop.f32.mrf.mxu0
    %v230 = vadd.f32 0.0, %v229
    %v231 = vpop.f32.mrf.mxu0
    %v232 = vadd.f32 0.0, %v231
    %233 = vmatmul.bf16.gmra.mxu0 %v141
    %v234 = vpop.f32.mrf.mxu0
    %v235 = vadd.f32 0.0, %v234
    %v236 = vpop.f32.mrf.mxu0
    %v237 = vadd.f32 0.0, %v236
    %238 = vmatmul.bf16.gmra.mxu0 %v142
    %v239 = vpop.f32.mrf.mxu0
    %v240 = vadd.f32 0.0, %v239
    %v241 = vpop.f32.mrf.mxu0
    %v242 = vadd.f32 0.0, %v241
    %243 = vmatmul.bf16.gmra.mxu0 %v143
    %v244 = vpop.f32.mrf.mxu0
    %v245 = vadd.f32 0.0, %v244
    %v246 = vpop.f32.mrf.mxu0
    %v247 = vadd.f32 0.0, %v246
    %248 = vdwg.mxu0
    %v249 = vadd.f32 %v56, %v210
    %v250 = vadd.f32 %v57, %v212
    %v251 = vadd.f32 %v58, %v215
    %v252 = vadd.f32 %v59, %v217
    %v253 = vadd.f32 %v60, %v220
    %v254 = vadd.f32 %v61, %v222
    %v255 = vadd.f32 %v62, %v225
    %v256 = vadd.f32 %v63, %v227
    %v257 = vadd.f32 %v64, %v230
    %v258 = vadd.f32 %v65, %v232
    %v259 = vadd.f32 %v66, %v235
    %v260 = vadd.f32 %v67, %v237
    %v261 = vadd.f32 %v68, %v240
    %v262 = vadd.f32 %v69, %v242
    %v263 = vadd.f32 %v70, %v245
    %v264 = vadd.f32 %v71, %v247
    %vm265 = vcmask 277504
    %266 = vst.msk [vmem:[#allocation2] sm:$0xff] %vm265, %v249
    %267 = vst.msk [vmem:[#allocation2 + $0x8] sm:$0xff] %vm265, %v250
    %268 = vst.msk [vmem:[#allocation2 + $0x10] sm:$0xff] %vm265, %v251
    %269 = vst.msk [vmem:[#allocation2 + $0x18] sm:$0xff] %vm265, %v252
    %270 = vst.msk [vmem:[#allocation2 + $0x20] sm:$0xff] %vm265, %v253
    %271 = vst.msk [vmem:[#allocation2 + $0x28] sm:$0xff] %vm265, %v254
    %272 = vst.msk [vmem:[#allocation2 + $0x30] sm:$0xff] %vm265, %v255
    %273 = vst.msk [vmem:[#allocation2 + $0x38] sm:$0xff] %vm265, %v256
    %274 = vst.msk [vmem:[#allocation2 + $0x40] sm:$0xff] %vm265, %v257
    %275 = vst.msk [vmem:[#allocation2 + $0x48] sm:$0xff] %vm265, %v258
    %276 = vst.msk [vmem:[#allocation2 + $0x50] sm:$0xff] %vm265, %v259
    %277 = vst.msk [vmem:[#allocation2 + $0x58] sm:$0xff] %vm265, %v260
    %278 = vst.msk [vmem:[#allocation2 + $0x60] sm:$0xff] %vm265, %v261
    %279 = vst.msk [vmem:[#allocation2 + $0x68] sm:$0xff] %vm265, %v262
    %280 = vst.msk [vmem:[#allocation2 + $0x70] sm:$0xff] %vm265, %v263
    %281 = vst.msk [vmem:[#allocation2 + $0x78] sm:$0xff] %vm265, %v264
    // Predicated region
    $region26: #{tpu_custom_call.1} parent=1 // pred_check
      %p282 = pneg %p35
    $region27: #{tpu_custom_call.1} parent=1 // pred_check_branch
      %284 = sbr.rel (%p282) target = $region29
    $region28: #{tpu_custom_call.1} parent=1 // pred_region
      %v285 = vld [vmem:[#allocation2] sm:$0xff]
      %v286 = vld [vmem:[#allocation2 + $0x8] sm:$0xff]
      %v287 = vld [vmem:[#allocation2 + $0x10] sm:$0xff]
      %v288 = vld [vmem:[#allocation2 + $0x18] sm:$0xff]
      %v289 = vld [vmem:[#allocation2 + $0x20] sm:$0xff]
      %v290 = vld [vmem:[#allocation2 + $0x28] sm:$0xff]
      %v291 = vld [vmem:[#allocation2 + $0x30] sm:$0xff]
      %v292 = vld [vmem:[#allocation2 + $0x38] sm:$0xff]
      %v293 = vld [vmem:[#allocation2 + $0x40] sm:$0xff]
      %v294 = vld [vmem:[#allocation2 + $0x48] sm:$0xff]
      %v295 = vld [vmem:[#allocation2 + $0x50] sm:$0xff]
      %v296 = vld [vmem:[#allocation2 + $0x58] sm:$0xff]
      %v297 = vld [vmem:[#allocation2 + $0x60] sm:$0xff]
      %v298 = vld [vmem:[#allocation2 + $0x68] sm:$0xff]
      %v299 = vld [vmem:[#allocation2 + $0x70] sm:$0xff]
      %v300 = vld [vmem:[#allocation2 + $0x78] sm:$0xff]
      %v301 = vpack.c.bf16 %v286, %v285
      %v302 = vpack.c.bf16 %v288, %v287
      %v303 = vpack.c.bf16 %v290, %v289
      %v304 = vpack.c.bf16 %v292, %v291
      %v305 = vpack.c.bf16 %v294, %v293
      %v306 = vpack.c.bf16 %v296, %v295
      %v307 = vpack.c.bf16 %v298, %v297
      %v308 = vpack.c.bf16 %v300, %v299
      %v309 = vld [vmem:[#allocation3] sm:$0xff]
      %v310 = vld [vmem:[#allocation3 + $0x8] sm:$0xff]
      %v311 = vld [vmem:[#allocation3 + $0x10] sm:$0xff]
      %v312 = vld [vmem:[#allocation3 + $0x18] sm:$0xff]
      %v313 = vld [vmem:[#allocation3 + $0x20] sm:$0x11]
      %v314 = vld [vmem:[%s3] sm:$0x3]
      %v316 = vperm.slane %v314, 0
      %v317 = vperm.slane %v314, 1
      %v325 = vunpack.c.l.b16 %v309
      %v326 = vunpack.c.h.b16 %v309
      %v327 = vunpack.c.l.b16 %v310
      %v328 = vunpack.c.h.b16 %v310
      %v329 = vunpack.c.l.b16 %v311
      %v330 = vunpack.c.h.b16 %v311
      %v331 = vunpack.c.l.b16 %v312
      %v332 = vunpack.c.h.b16 %v312
      %v333 = vunpack.c.l.b16 %v313
      %v334 = vunpack.c.h.b16 %v313
      %v335 = vpack.c.b16 %v327, %v325
      %v336 = vpack.c.b16 %v328, %v326
      %v337 = vpack.c.b16 %v331, %v329
      %v338 = vpack.c.b16 %v332, %v330
      %v339 = vpack.c.b16 %v333, %v333
      %v340 = vpack.c.b16 %v334, %v334
      %v346 = vsel %vm265, %v301, 0
      %v349 = vsel %vm265, %v302, 0
      %v352 = vsel %vm265, %v303, 0
      %v355 = vsel %vm265, %v304, 0
      %v358 = vsel %vm265, %v305, 0
      %v361 = vsel %vm265, %v306, 0
      %v364 = vsel %vm265, %v307, 0
      %v367 = vsel %vm265, %v308, 0
      %vm369 = vcmask 1040384
      %v371 = vsel %vm369, %v339, 0
      %v374 = vsel %vm369, %v340, 0
      %376 = vmatpush.bf16.msra.mxu0 0
      %377 = vmatpush.bf16.msra.mxu0 0
      %378 = vmatpush.bf16.msra.mxu0 0
      %379 = vmatpush.bf16.msra.mxu0 0
      %380 = vmatpush.bf16.msra.mxu0 0
      %381 = vmatpush.bf16.msra.mxu0 %v371
      %382 = vmatpush.bf16.msra.mxu0 %v337
      %383 = vmatpush.bf16.msra.mxu0 %v335
      %384 = vmatmul.bf16.gmra.mxu0 %v346
      %v385 = vpop.f32.mrf.mxu0
      %v386 = vadd.f32 %v316, %v385
      %v387 = vpop.f32.mrf.mxu0
      %v388 = vadd.f32 %v316, %v387
      %389 = vmatmul.bf16.gmra.mxu0 %v349
      %v390 = vpop.f32.mrf.mxu0
      %v391 = vadd.f32 %v316, %v390
      %v392 = vpop.f32.mrf.mxu0
      %v393 = vadd.f32 %v316, %v392
      %394 = vmatmul.bf16.gmra.mxu0 %v352
      %v395 = vpop.f32.mrf.mxu0
      %v396 = vadd.f32 %v316, %v395
      %v397 = vpop.f32.mrf.mxu0
      %v398 = vadd.f32 %v316, %v397
      %399 = vmatmul.bf16.gmra.mxu0 %v355
      %v400 = vpop.f32.mrf.mxu0
      %v401 = vadd.f32 %v316, %v400
      %v402 = vpop.f32.mrf.mxu0
      %v403 = vadd.f32 %v316, %v402
      %404 = vmatmul.bf16.gmra.mxu0 %v358
      %v405 = vpop.f32.mrf.mxu0
      %v406 = vadd.f32 %v316, %v405
      %v407 = vpop.f32.mrf.mxu0
      %v408 = vadd.f32 %v316, %v407
      %409 = vmatmul.bf16.gmra.mxu0 %v361
      %v410 = vpop.f32.mrf.mxu0
      %v411 = vadd.f32 %v316, %v410
      %v412 = vpop.f32.mrf.mxu0
      %v413 = vadd.f32 %v316, %v412
      %414 = vmatmul.bf16.gmra.mxu0 %v364
      %v415 = vpop.f32.mrf.mxu0
      %v416 = vadd.f32 %v316, %v415
      %v417 = vpop.f32.mrf.mxu0
      %v418 = vadd.f32 %v316, %v417
      %419 = vmatmul.bf16.gmra.mxu0 %v367
      %v420 = vpop.f32.mrf.mxu0
      %v421 = vadd.f32 %v316, %v420
      %v422 = vpop.f32.mrf.mxu0
      %v423 = vadd.f32 %v316, %v422
      %424 = vdwg.mxu0
      %425 = vmatpush.bf16.msra.mxu0 0
      %426 = vmatpush.bf16.msra.mxu0 0
      %427 = vmatpush.bf16.msra.mxu0 0
      %428 = vmatpush.bf16.msra.mxu0 0
      %429 = vmatpush.bf16.msra.mxu0 0
      %430 = vmatpush.bf16.msra.mxu0 %v374
      %431 = vmatpush.bf16.msra.mxu0 %v338
      %432 = vmatpush.bf16.msra.mxu0 %v336
      %433 = vmatmul.bf16.gmra.mxu0 %v346
      %v434 = vpop.f32.mrf.mxu0
      %v435 = vadd.f32 %v317, %v434
      %v436 = vpop.f32.mrf.mxu0
      %v437 = vadd.f32 %v317, %v436
      %438 = vmatmul.bf16.gmra.mxu0 %v349
      %v439 = vpop.f32.mrf.mxu0
      %v440 = vadd.f32 %v317, %v439
      %v441 = vpop.f32.mrf.mxu0
      %v442 = vadd.f32 %v317, %v441
      %443 = vmatmul.bf16.gmra.mxu0 %v352
      %v444 = vpop.f32.mrf.mxu0
      %v445 = vadd.f32 %v317, %v444
      %v446 = vpop.f32.mrf.mxu0
      %v447 = vadd.f32 %v317, %v446
      %448 = vmatmul.bf16.gmra.mxu0 %v355
      %v449 = vpop.f32.mrf.mxu0
      %v450 = vadd.f32 %v317, %v449
      %v451 = vpop.f32.mrf.mxu0
      %v452 = vadd.f32 %v317, %v451
      %453 = vmatmul.bf16.gmra.mxu0 %v358
      %v454 = vpop.f32.mrf.mxu0
      %v455 = vadd.f32 %v317, %v454
      %v456 = vpop.f32.mrf.mxu0
      %v457 = vadd.f32 %v317, %v456
      %458 = vmatmul.bf16.gmra.mxu0 %v361
      %v459 = vpop.f32.mrf.mxu0
      %v460 = vadd.f32 %v317, %v459
      %v461 = vpop.f32.mrf.mxu0
      %v462 = vadd.f32 %v317, %v461
      %463 = vmatmul.bf16.gmra.mxu0 %v364
      %v464 = vpop.f32.mrf.mxu0
      %v465 = vadd.f32 %v317, %v464
      %v466 = vpop.f32.mrf.mxu0
      %v467 = vadd.f32 %v317, %v466
      %468 = vmatmul.bf16.gmra.mxu0 %v367
      %v469 = vpop.f32.mrf.mxu0
      %v470 = vadd.f32 %v317, %v469
      %v471 = vpop.f32.mrf.mxu0
      %v472 = vadd.f32 %v317, %v471
      %473 = vdwg.mxu0
      %v474 = vmax.f32 %v386, 0.0
      %v475 = vmax.f32 %v435, 0.0
      %v476 = vmax.f32 %v388, 0.0
      %v477 = vmax.f32 %v437, 0.0
      %v478 = vmax.f32 %v391, 0.0
      %v479 = vmax.f32 %v440, 0.0
      %v480 = vmax.f32 %v393, 0.0
      %v481 = vmax.f32 %v442, 0.0
      %v482 = vmax.f32 %v396, 0.0
      %v483 = vmax.f32 %v445, 0.0
      %v484 = vmax.f32 %v398, 0.0
      %v485 = vmax.f32 %v447, 0.0
      %v486 = vmax.f32 %v401, 0.0
      %v487 = vmax.f32 %v450, 0.0
      %v488 = vmax.f32 %v403, 0.0
      %v489 = vmax.f32 %v452, 0.0
      %v490 = vmax.f32 %v406, 0.0
      %v491 = vmax.f32 %v455, 0.0
      %v492 = vmax.f32 %v408, 0.0
      %v493 = vmax.f32 %v457, 0.0
      %v494 = vmax.f32 %v411, 0.0
      %v495 = vmax.f32 %v460, 0.0
      %v496 = vmax.f32 %v413, 0.0
      %v497 = vmax.f32 %v462, 0.0
      %v498 = vmax.f32 %v416, 0.0
      %v499 = vmax.f32 %v465, 0.0
      %v500 = vmax.f32 %v418, 0.0
      %v501 = vmax.f32 %v467, 0.0
      %v502 = vmax.f32 %v421, 0.0
      %v503 = vmax.f32 %v470, 0.0
      %v504 = vmax.f32 %v423, 0.0
      %v505 = vmax.f32 %v472, 0.0
      %v506 = vpack.c.bf16 %v475, %v474
      %v507 = vpack.c.bf16 %v477, %v476
      %v508 = vpack.c.bf16 %v479, %v478
      %v509 = vpack.c.bf16 %v481, %v480
      %v510 = vpack.c.bf16 %v483, %v482
      %v511 = vpack.c.bf16 %v485, %v484
      %v512 = vpack.c.bf16 %v487, %v486
      %v513 = vpack.c.bf16 %v489, %v488
      %v514 = vpack.c.bf16 %v491, %v490
      %v515 = vpack.c.bf16 %v493, %v492
      %v516 = vpack.c.bf16 %v495, %v494
      %v517 = vpack.c.bf16 %v497, %v496
      %v518 = vpack.c.bf16 %v499, %v498
      %v519 = vpack.c.bf16 %v501, %v500
      %v520 = vpack.c.bf16 %v503, %v502
      %v521 = vpack.c.bf16 %v505, %v504
      %522 = vst [vmem:[#allocation6] sm:$0xff] %v506
      %523 = vst [vmem:[#allocation6 + $0x8] sm:$0xff] %v507
      %524 = vst [vmem:[#allocation6 + $0x10] sm:$0xff] %v508
      %525 = vst [vmem:[#allocation6 + $0x18] sm:$0xff] %v509
      %526 = vst [vmem:[#allocation6 + $0x20] sm:$0xff] %v510
      %527 = vst [vmem:[#allocation6 + $0x28] sm:$0xff] %v511
      %528 = vst [vmem:[#allocation6 + $0x30] sm:$0xff] %v512
      %529 = vst [vmem:[#allocation6 + $0x38] sm:$0xff] %v513
      %530 = vst [vmem:[#allocation6 + $0x40] sm:$0xff] %v514
      %531 = vst [vmem:[#allocation6 + $0x48] sm:$0xff] %v515
      %532 = vst [vmem:[#allocation6 + $0x50] sm:$0xff] %v516
      %533 = vst [vmem:[#allocation6 + $0x58] sm:$0xff] %v517
      %534 = vst [vmem:[#allocation6 + $0x60] sm:$0xff] %v518
      %535 = vst [vmem:[#allocation6 + $0x68] sm:$0xff] %v519
      %536 = vst [vmem:[#allocation6 + $0x70] sm:$0xff] %v520
      %537 = vst [vmem:[#allocation6 + $0x78] sm:$0xff] %v521
    $region29: #{tpu_custom_call.1} parent=1 // pred_fallthru
      _
    // Predicated region
    $region30: #{tpu_custom_call.1} parent=1 // pred_check
      _
    $region31: #{tpu_custom_call.1} parent=1 // pred_check_branch
      %539 = sbr.rel (0) target = $region33
    $region32: #{tpu_custom_call.1} parent=1 // pred_region
      %541 = vsyncadd [#allocation5], 0
      %s542 = sshll.u32 [#allocation6], 4
      %s543 = int_to_ptr.vmem [resolvable:$true] %s542
      %s544 = sshll.u32 %s4, 4
      %s545 = int_to_ptr.hbm [resolvable:$true] %s544
      %550 = dma.vmem_to_hbm [thread:$0]  %s543, 2048, %s545, [#allocation5], 128, 128, 8
    $region33: #{tpu_custom_call.1} parent=1 // pred_fallthru
      _
    // Predicated region
    $region34: #{tpu_custom_call.1} parent=1 // pred_check
      _
    $region35: #{tpu_custom_call.1} parent=1 // pred_check_branch
      %552 = sbr.rel (0) target = $region37
    $region36: #{tpu_custom_call.1} parent=1 // pred_region
      %554 = dma.done [#allocation5], 2048
    $region37: #{tpu_custom_call.1} parent=1 // pred_fallthru
      _
    %555 = vsyncpa [#allocation4], 1
    %556 = vsyncpa [#allocation5], 1

</llo_original>
